<compile_context>
chip_gen: v6e
topology: v6e:2x2x1
jax: 0.10.0
libtpu: 0.0.40
codegen_flags: <defaults>
</compile_context>

<pallas_src>
import jax
import jax.numpy as jnp
from jax.experimental import pallas as pl
from jax.experimental.pallas import tpu as pltpu

BN_EPS = 1e-5


# --------------------------------------------------------------------------
# Kernel: one batch tile, feature-major ([features, batch_tile]) layout.
# --------------------------------------------------------------------------
def _mlp_kernel(xT_ref, w1_ref, b1_ref, w2_ref, b2_ref, w3d_ref, b3d_ref, o_ref):
    # layer1 (+ folded BN) + ReLU   (Dropout == identity in eval mode)
    # bf16 x bf16 on the MXU, f32 accumulation.
    h = jnp.dot(w1_ref[...], xT_ref[...],
                preferred_element_type=jnp.float32) + b1_ref[...]        # (64, TB) f32
    h = jnp.maximum(h, 0.0)

    # layer2 (+ folded BN) + ReLU
    h = jnp.dot(w2_ref[...], h.astype(jnp.bfloat16),
                preferred_element_type=jnp.float32) + b2_ref[...]        # (32, TB) f32
    h = jnp.maximum(h, 0.0)

    # layer3 + 2-class softmax via the sigmoid identity:
    #   d = logit0 - logit1 ; p0 = sigmoid(d) ; p1 = 1 - p0
    d = jnp.sum(w3d_ref[...] * h, axis=0, keepdims=True) + b3d_ref[...]  # (1, TB)
    p0 = 1.0 / (1.0 + jnp.exp(-d))
    o_ref[0:1, :] = p0.astype(o_ref.dtype)
    o_ref[1:2, :] = (1.0 - p0).astype(o_ref.dtype)


# --------------------------------------------------------------------------
# Wrapper
# --------------------------------------------------------------------------
def _round_up(n, m):
    return ((n + m - 1) // m) * m


def _fold_bn(params):
    """Fold eval-mode BatchNorm1d into the preceding Linear layers."""
    s1 = params["g1"] * jax.lax.rsqrt(params["rv1"] + BN_EPS)            # (64,)
    w1f = s1[:, None] * params["w1"]                                     # (64, in)
    b1f = s1 * (params["b1"] - params["rm1"]) + params["beta1"]          # (64,)
    s2 = params["g2"] * jax.lax.rsqrt(params["rv2"] + BN_EPS)            # (32,)
    w2f = s2[:, None] * params["w2"]                                     # (32, 64)
    b2f = s2 * (params["b2"] - params["rm2"]) + params["beta2"]          # (32,)
    w3d = params["w3"][0] - params["w3"][1]                              # (32,)
    b3d = params["b3"][0] - params["b3"][1]                              # ()
    return w1f, b1f, w2f, b2f, w3d, b3d


def combined_model_forward(x, params, *, stream_dtype=jnp.bfloat16, tb_max=1024):
    """x: [batch, input_size] float32 -> [batch, 2] float32 probabilities."""
    batch, input_size = x.shape
    f32 = jnp.float32

    # Fold BN once, outside the kernel; stream weights/x as bf16.
    w1f, b1f, w2f, b2f, w3d, b3d = _fold_bn(params)
    w1t = w1f.astype(stream_dtype)                       # (64, in)
    w2t = w2f.astype(stream_dtype)                       # (32, 64)
    b1c = b1f.reshape(-1, 1).astype(f32)                 # (64, 1)
    b2c = b2f.reshape(-1, 1).astype(f32)                 # (32, 1)
    w3c = w3d.reshape(-1, 1).astype(f32)                 # (32, 1)
    b3c = b3d.reshape(1, 1).astype(f32)                  # (1, 1)

    # Batch lives on the 128-lane axis -> tile is a multiple of 128, capped at
    # tb_max (sweepable; VMEM use is tiny, fits v7x's 64 MiB easily).
    tb_max = _round_up(max(tb_max, 128), 128)
    tb = tb_max if batch >= tb_max else _round_up(batch, 128)
    batch_p = _round_up(batch, tb)
    grid = (batch_p // tb,)

    # Feature-major, zero-padded input stream: (input_size, batch_p).
    xT = x.astype(stream_dtype).T
    if batch_p != batch:
        xT = jnp.pad(xT, ((0, 0), (0, batch_p - batch)))

    const = lambda i: (0, 0)
    itemsize = jnp.dtype(stream_dtype).itemsize
    cost = pl.CostEstimate(
        flops=2 * batch_p * (input_size * 64 + 64 * 32 + 32),
        transcendentals=batch_p,
        bytes_accessed=(xT.size * itemsize + batch_p * 2 * 4
                        + (w1t.size + w2t.size) * itemsize
                        + (b1c.size + b2c.size + w3c.size + b3c.size) * 4),
    )

    outT = pl.pallas_call(
        _mlp_kernel,
        out_shape=jax.ShapeDtypeStruct((2, batch_p), f32),
        grid_spec=pltpu.PrefetchScalarGridSpec(
            num_scalar_prefetch=0,
            grid=grid,
            in_specs=[
                pl.BlockSpec((input_size, tb), lambda i: (0, i)),  # streamed x tile
                pl.BlockSpec(w1t.shape, const),                    # params stay resident
                pl.BlockSpec(b1c.shape, const),
                pl.BlockSpec(w2t.shape, const),
                pl.BlockSpec(b2c.shape, const),
                pl.BlockSpec(w3c.shape, const),
                pl.BlockSpec(b3c.shape, const),
            ],
            out_specs=pl.BlockSpec((2, tb), lambda i: (0, i)),     # lane-dense output
        ),
        compiler_params=pltpu.CompilerParams(
            dimension_semantics=("parallel",),
            vmem_limit_bytes=32 * 1024 * 1024,
        ),
        cost_estimate=cost,
    )(xT, w1t, b1c, w2t, b2c, w3c, b3c)

    return outT[:, :batch].T                             # (batch, 2)


# --------------------------------------------------------------------------
# Params (PyTorch layout) + references
# --------------------------------------------------------------------------
def init_params(input_size, key):
    """Deterministic params; shapes mirror the PyTorch module (eval mode).
    Running stats / affine params are made non-trivial to exercise BN folding."""
    f32 = jnp.float32
    ks = jax.random.split(key, 12)
    return dict(
        w1=0.1 * jax.random.normal(ks[0], (64, input_size), f32),   # [out, in]
        b1=0.01 * jax.random.normal(ks[1], (64,), f32),
        g1=1.0 + 0.1 * jax.random.normal(ks[2], (64,), f32),
        beta1=0.05 * jax.random.normal(ks[3], (64,), f32),
        rm1=0.1 * jax.random.normal(ks[4], (64,), f32),
        rv1=0.9 + 0.2 * jax.random.uniform(ks[5], (64,), f32),
        w2=0.1 * jax.random.normal(ks[6], (32, 64), f32),
        b2=0.01 * jax.random.normal(ks[7], (32,), f32),
        g2=1.0 + 0.1 * jax.random.normal(ks[8], (32,), f32),
        beta2=0.05 * jax.random.normal(ks[9], (32,), f32),
        rm2=0.1 * jax.random.normal(ks[10], (32,), f32),
        rv2=0.9 + 0.2 * jax.random.uniform(ks[11], (32,), f32),
        w3=0.1 * jax.random.normal(jax.random.fold_in(key, 100), (2, 32), f32),
        b3=0.01 * jax.random.normal(jax.random.fold_in(key, 101), (2,), f32),
    )


def reference_forward(x, p):
    """Pure-f32 JAX mirror of the PyTorch module in eval mode."""
    h = x @ p["w1"].T + p["b1"]
    h = (h - p["rm1"]) * jax.lax.rsqrt(p["rv1"] + BN_EPS) * p["g1"] + p["beta1"]
    h = jnp.maximum(h, 0.0)
    h = h @ p["w2"].T + p["b2"]
    h = (h - p["rm2"]) * jax.lax.rsqrt(p["rv2"] + BN_EPS) * p["g2"] + p["beta2"]
    h = jnp.maximum(h, 0.0)
    logits = h @ p["w3"].T + p["b3"]
    return jax.nn.softmax(logits, axis=1)


def reference_forward_quantized(x, p, stream_dtype):
    """Mirrors the kernel's exact arithmetic (folded BN + bf16 MXU matmuls)."""
    f32 = jnp.float32
    w1f, b1f, w2f, b2f, w3d, b3d = _fold_bn(p)
    q = lambda a: a.astype(stream_dtype).astype(f32)
    hp = jax.lax.Precision.HIGHEST
    h = jnp.maximum(jnp.dot(q(x), q(w1f).T, precision=hp) + b1f, 0.0)
    h = jnp.maximum(jnp.dot(q(h), q(w2f).T, precision=hp) + b2f, 0.0)
    d = jnp.dot(h, w3d, precision=hp) + b3d
    p0 = jax.nn.sigmoid(d)
    return jnp.stack([p0, 1.0 - p0], axis=1)


if __name__ == "__main__":
    batch, input_size = 8, 16
    key = jax.random.PRNGKey(0)
    kx, kp = jax.random.split(key)
    x = jax.random.normal(kx, (batch, input_size), jnp.float32)
    params = init_params(input_size, kp)

    out = jax.block_until_ready(combined_model_forward(x, params))
    assert out.shape == (batch, 2)
    assert bool(jnp.all(jnp.isfinite(out)))
    assert jnp.allclose(jnp.sum(out, axis=1), 1.0, atol=1e-5)
    # Tight check against a reference using the kernel's exact arithmetic.
    refq = reference_forward_quantized(x, params, jnp.bfloat16)
    assert jnp.allclose(out, refq, atol=2e-3), float(jnp.max(jnp.abs(out - refq)))
    # Check against the pure-f32 PyTorch mirror (bf16-streaming tolerance).
    ref = reference_forward(x, params)
    assert jnp.allclose(out, ref, atol=2e-2), float(jnp.max(jnp.abs(out - ref)))

    # Multi-tile grid path: batch=300, tile=128 -> 3 grid steps + padding.
    x2 = jax.random.normal(jax.random.PRNGKey(1), (300, input_size), jnp.float32)
    out2 = jax.block_until_ready(combined_model_forward(x2, params, tb_max=128))
    assert out2.shape == (300, 2)
    assert jnp.allclose(jnp.sum(out2, axis=1), 1.0, atol=1e-5)
    assert jnp.allclose(out2, reference_forward(x2, params), atol=2e-2)

    print("KERNEL_OK")
</pallas_src>

<mosaic_0001>
module attributes {stable_mosaic.version = 11 : i64} {
  func.func @_mlp_kernel(%arg0: i32, %arg1: memref<16x128xbf16, #tpu.memory_space<vmem>>, %arg2: memref<64x16xbf16, #tpu.memory_space<vmem>>, %arg3: memref<64x1xf32, #tpu.memory_space<vmem>>, %arg4: memref<32x64xbf16, #tpu.memory_space<vmem>>, %arg5: memref<32x1xf32, #tpu.memory_space<vmem>>, %arg6: memref<32x1xf32, #tpu.memory_space<vmem>>, %arg7: memref<1x1xf32, #tpu.memory_space<vmem>>, %arg8: memref<2x128xf32, #tpu.memory_space<vmem>>) attributes {dimension_semantics = [#tpu.dimension_semantics<parallel>], iteration_bounds = array<i64: 1>, scalar_prefetch = 0 : i64, scratch_operands = 0 : i64, tpu.core_type = #tpu.core_type<tc>, window_params = [{transform_indices = @transform_0, window_bounds = array<i64: 16, 128>}, {pipeline_mode = #tpu.pipeline_mode<synchronous>, transform_indices = @transform_1, window_bounds = array<i64: 64, 16>}, {pipeline_mode = #tpu.pipeline_mode<synchronous>, transform_indices = @transform_2, window_bounds = array<i64: 64, 1>}, {pipeline_mode = #tpu.pipeline_mode<synchronous>, transform_indices = @transform_3, window_bounds = array<i64: 32, 64>}, {pipeline_mode = #tpu.pipeline_mode<synchronous>, transform_indices = @transform_4, window_bounds = array<i64: 32, 1>}, {pipeline_mode = #tpu.pipeline_mode<synchronous>, transform_indices = @transform_5, window_bounds = array<i64: 32, 1>}, {pipeline_mode = #tpu.pipeline_mode<synchronous>, transform_indices = @transform_6, window_bounds = array<i64: 1, 1>}, {transform_indices = @transform_7, window_bounds = array<i64: 2, 128>}]} {
    %c0 = arith.constant 0 : index
    %c0_0 = arith.constant 0 : index
    %0 = vector.load %arg2[%c0, %c0_0] : memref<64x16xbf16, #tpu.memory_space<vmem>>, vector<64x16xbf16>
    %c0_1 = arith.constant 0 : index
    %c0_2 = arith.constant 0 : index
    %1 = vector.load %arg1[%c0_1, %c0_2] : memref<16x128xbf16, #tpu.memory_space<vmem>>, vector<16x128xbf16>
    %cst = arith.constant dense<0.000000e+00> : vector<64x128xf32>
    %2 = tpu.matmul %0, %1, %cst {dimension_numbers = #tpu.dot_dimension_numbers<[1], [0], [0], [1], [0, 0, 1, 1], [], []>} : vector<64x16xbf16>, vector<16x128xbf16>, vector<64x128xf32> -> vector<64x128xf32>
    %c0_3 = arith.constant 0 : index
    %c0_4 = arith.constant 0 : index
    %3 = vector.load %arg3[%c0_3, %c0_4] : memref<64x1xf32, #tpu.memory_space<vmem>>, vector<64x1xf32>
    %4 = vector.broadcast %3 : vector<64x1xf32> to vector<64x128xf32>
    %5 = arith.addf %2, %4 : vector<64x128xf32>
    %cst_5 = arith.constant 0.000000e+00 : f32
    %6 = vector.broadcast %cst_5 : f32 to vector<64x128xf32>
    %7 = arith.maximumf %5, %6 : vector<64x128xf32>
    %c0_6 = arith.constant 0 : index
    %c0_7 = arith.constant 0 : index
    %8 = vector.load %arg4[%c0_6, %c0_7] : memref<32x64xbf16, #tpu.memory_space<vmem>>, vector<32x64xbf16>
    %9 = arith.truncf %7 : vector<64x128xf32> to vector<64x128xbf16>
    %cst_8 = arith.constant dense<0.000000e+00> : vector<32x128xf32>
    %10 = tpu.matmul %8, %9, %cst_8 {dimension_numbers = #tpu.dot_dimension_numbers<[1], [0], [0], [1], [0, 0, 1, 1], [], []>} : vector<32x64xbf16>, vector<64x128xbf16>, vector<32x128xf32> -> vector<32x128xf32>
    %c0_9 = arith.constant 0 : index
    %c0_10 = arith.constant 0 : index
    %11 = vector.load %arg5[%c0_9, %c0_10] : memref<32x1xf32, #tpu.memory_space<vmem>>, vector<32x1xf32>
    %12 = vector.broadcast %11 : vector<32x1xf32> to vector<32x128xf32>
    %13 = arith.addf %10, %12 : vector<32x128xf32>
    %cst_11 = arith.constant 0.000000e+00 : f32
    %14 = vector.broadcast %cst_11 : f32 to vector<32x128xf32>
    %15 = arith.maximumf %13, %14 : vector<32x128xf32>
    %c0_12 = arith.constant 0 : index
    %c0_13 = arith.constant 0 : index
    %16 = vector.load %arg6[%c0_12, %c0_13] : memref<32x1xf32, #tpu.memory_space<vmem>>, vector<32x1xf32>
    %17 = vector.broadcast %16 : vector<32x1xf32> to vector<32x128xf32>
    %18 = arith.mulf %17, %15 : vector<32x128xf32>
    %cst_14 = arith.constant dense<0.000000e+00> : vector<128xf32>
    %19 = vector.multi_reduction <add>, %18, %cst_14 [0] : vector<32x128xf32> to vector<128xf32>
    %20 = vector.shape_cast %19 : vector<128xf32> to vector<1x128xf32>
    %c0_15 = arith.constant 0 : index
    %c0_16 = arith.constant 0 : index
    %21 = vector.load %arg7[%c0_15, %c0_16] : memref<1x1xf32, #tpu.memory_space<vmem>>, vector<1x1xf32>
    %22 = vector.broadcast %21 : vector<1x1xf32> to vector<1x128xf32>
    %23 = arith.addf %20, %22 : vector<1x128xf32>
    %cst_17 = arith.constant 0.000000e+00 : f32
    %24 = vector.broadcast %cst_17 : f32 to vector<1x128xf32>
    %25 = arith.subf %24, %23 : vector<1x128xf32>
    %26 = math.exp %25 : vector<1x128xf32>
    %cst_18 = arith.constant 1.000000e+00 : f32
    %27 = vector.broadcast %cst_18 : f32 to vector<1x128xf32>
    %28 = arith.addf %27, %26 : vector<1x128xf32>
    %cst_19 = arith.constant 1.000000e+00 : f32
    %29 = vector.broadcast %cst_19 : f32 to vector<1x128xf32>
    %30 = arith.divf %29, %28 : vector<1x128xf32>
    %c0_20 = arith.constant 0 : index
    %c0_21 = arith.constant 0 : index
    %31 = vector.load %arg8[%c0_20, %c0_21] : memref<2x128xf32, #tpu.memory_space<vmem>>, vector<1x128xf32>
    tpu.vector_store %arg8[%c0_20, %c0_21], %30 {strides = array<i32>} : memref<2x128xf32, #tpu.memory_space<vmem>>, vector<1x128xf32>,
    %cst_22 = arith.constant 1.000000e+00 : f32
    %32 = vector.broadcast %cst_22 : f32 to vector<1x128xf32>
    %33 = arith.subf %32, %30 : vector<1x128xf32>
    %c1 = arith.constant 1 : index
    %c0_23 = arith.constant 0 : index
    %34 = vector.load %arg8[%c1, %c0_23] : memref<2x128xf32, #tpu.memory_space<vmem>>, vector<1x128xf32>
    tpu.vector_store %arg8[%c1, %c0_23], %33 {strides = array<i32>} : memref<2x128xf32, #tpu.memory_space<vmem>>, vector<1x128xf32>,
    return
  }
  func.func @transform_0(%arg0: i32) -> (i32, i32) {
    %c0_i32 = arith.constant 0 : i32
    %c0_i32_0 = arith.constant 0 : i32
    return %c0_i32, %arg0 : i32, i32
  }
  func.func @transform_1(%arg0: i32) -> (i32, i32) {
    %c0_i32 = arith.constant 0 : i32
    %c0_i32_0 = arith.constant 0 : i32
    %c0_i32_1 = arith.constant 0 : i32
    return %c0_i32, %c0_i32_0 : i32, i32
  }
  func.func @transform_2(%arg0: i32) -> (i32, i32) {
    %c0_i32 = arith.constant 0 : i32
    %c0_i32_0 = arith.constant 0 : i32
    %c0_i32_1 = arith.constant 0 : i32
    return %c0_i32, %c0_i32_0 : i32, i32
  }
  func.func @transform_3(%arg0: i32) -> (i32, i32) {
    %c0_i32 = arith.constant 0 : i32
    %c0_i32_0 = arith.constant 0 : i32
    %c0_i32_1 = arith.constant 0 : i32
    return %c0_i32, %c0_i32_0 : i32, i32
  }
  func.func @transform_4(%arg0: i32) -> (i32, i32) {
    %c0_i32 = arith.constant 0 : i32
    %c0_i32_0 = arith.constant 0 : i32
    %c0_i32_1 = arith.constant 0 : i32
    return %c0_i32, %c0_i32_0 : i32, i32
  }
  func.func @transform_5(%arg0: i32) -> (i32, i32) {
    %c0_i32 = arith.constant 0 : i32
    %c0_i32_0 = arith.constant 0 : i32
    %c0_i32_1 = arith.constant 0 : i32
    return %c0_i32, %c0_i32_0 : i32, i32
  }
  func.func @transform_6(%arg0: i32) -> (i32, i32) {
    %c0_i32 = arith.constant 0 : i32
    %c0_i32_0 = arith.constant 0 : i32
    %c0_i32_1 = arith.constant 0 : i32
    return %c0_i32, %c0_i32_0 : i32, i32
  }
  func.func @transform_7(%arg0: i32) -> (i32, i32) {
    %c0_i32 = arith.constant 0 : i32
    %c0_i32_0 = arith.constant 0 : i32
    return %c0_i32, %arg0 : i32, i32
  }
}

</mosaic_0001>

<llo_original>
// kernel: tpu_custom_call.1
$region0: #{tpu_custom_call.1}
  #allocation0 [shape = 'u32[]', space=smem, size = 0x4, offset = 0x4, fixed_abs, tag = 'smem constant byte address 0x4 - core index']
  #allocation1 [shape = 'u32[144,128]{1,0:T(1,128)}', space=vmem, size = 0x12000, scoped, tag = 'internal scratch']
  #allocation2 [shape = 'f32[1,1]{1,0:T(1,128)S(1)}', space=vmem, size = 0x200, scoped, tag = 'scoped memory for tpu_custom_call.1']
  %s0 = inlined_call_operand.vmem [shape: bf16[16,128], index: 0, kind: input, shape index: {}]
  %s1 = inlined_call_operand.vmem [shape: bf16[64,16], index: 1, kind: input, shape index: {}]
  %s2 = inlined_call_operand.vmem [shape: f32[64,1], index: 2, kind: input, shape index: {}]
  %s3 = inlined_call_operand.vmem [shape: bf16[32,64], index: 3, kind: input, shape index: {}]
  %s4 = inlined_call_operand.vmem [shape: f32[32,1], index: 4, kind: input, shape index: {}]
  %s5 = inlined_call_operand.vmem [shape: f32[32,1], index: 5, kind: input, shape index: {}]
  %s6 = inlined_call_operand.<no memory space> [shape: f32[1,1], index: 6, kind: input, shape index: {}]
  %s7 = inlined_call_operand.hbm [shape: f32[2,128], index: 7, kind: output, shape index: {}]
  %s8 = sld [smem:[#allocation0]]
  $region38: #{tpu_custom_call.1} parent=0
    _
  %s10 = ssub.s32 1, %s8
  %s11 = scalar_select 0, %s10, %s8
  %v12 = vstv %s6
  %13 = vst [vmem:[#allocation2] sm:$0x1] %v12
  $region1: #{tpu_custom_call.1} parent=0
    #allocation3 [shape = 'u8[1024]{0}', space=vmem, size = 0x400, scoped, tag = 'output window, operand 0, single buffered']
    #allocation4 [shape = 's32[1]{0}', space=sflag, size = 0x4, scoped, tag = 'scoped memory for tpu_custom_call.1']
    %14 = vsyncpa [#allocation4], 0
    // Predicated region
    $region2: #{tpu_custom_call.1} parent=1 // pred_check
      _
    $region3: #{tpu_custom_call.1} parent=1 // pred_check_branch
      %16 = sbr.rel (0) target = $region5
    $region4: #{tpu_custom_call.1} parent=1 // pred_region
      _
    $region5: #{tpu_custom_call.1} parent=1 // pred_fallthru
      _
    // Predicated region
    $region6: #{tpu_custom_call.1} parent=1 // pred_check
      _
    $region7: #{tpu_custom_call.1} parent=1 // pred_check_branch
      %18 = sbr.rel (0) target = $region9
    $region8: #{tpu_custom_call.1} parent=1 // pred_region
      _
    $region9: #{tpu_custom_call.1} parent=1 // pred_fallthru
      _
    // Predicated region
    $region10: #{tpu_custom_call.1} parent=1 // pred_check
      _
    $region11: #{tpu_custom_call.1} parent=1 // pred_check_branch
      %20 = sbr.rel (0) target = $region13
    $region12: #{tpu_custom_call.1} parent=1 // pred_region
      _
    $region13: #{tpu_custom_call.1} parent=1 // pred_fallthru
      _
    // Predicated region
    $region14: #{tpu_custom_call.1} parent=1 // pred_check
      _
    $region15: #{tpu_custom_call.1} parent=1 // pred_check_branch
      %22 = sbr.rel (0) target = $region17
    $region16: #{tpu_custom_call.1} parent=1 // pred_region
      _
    $region17: #{tpu_custom_call.1} parent=1 // pred_fallthru
      _
    // Predicated region
    $region18: #{tpu_custom_call.1} parent=1 // pred_check
      _
    $region19: #{tpu_custom_call.1} parent=1 // pred_check_branch
      %24 = sbr.rel (0) target = $region21
    $region20: #{tpu_custom_call.1} parent=1 // pred_region
      _
    $region21: #{tpu_custom_call.1} parent=1 // pred_fallthru
      _
    // Predicated region
    $region22: #{tpu_custom_call.1} parent=1 // pred_check
      _
    $region23: #{tpu_custom_call.1} parent=1 // pred_check_branch
      %26 = sbr.rel (0) target = $region25
    $region24: #{tpu_custom_call.1} parent=1 // pred_region
      _
    $region25: #{tpu_custom_call.1} parent=1 // pred_fallthru
      _
    // Predicated region
    $region26: #{tpu_custom_call.1} parent=1 // pred_check
      _
    $region27: #{tpu_custom_call.1} parent=1 // pred_check_branch
      %28 = sbr.rel (0) target = $region29
    $region28: #{tpu_custom_call.1} parent=1 // pred_region
      _
    $region29: #{tpu_custom_call.1} parent=1 // pred_fallthru
      _
    %v30 = vld [vmem:[%s1] sm:$0xf]
    %v31 = vld [vmem:[%s1 + $0x4] sm:$0xf]
    %v32 = vld [vmem:[%s1 + $0x8] sm:$0xf]
    %v33 = vld [vmem:[%s1 + $0xc] sm:$0xf]
    %v34 = vld [vmem:[%s1 + $0x10] sm:$0xf]
    %v35 = vld [vmem:[%s1 + $0x14] sm:$0xf]
    %v36 = vld [vmem:[%s1 + $0x18] sm:$0xf]
    %v37 = vld [vmem:[%s1 + $0x1c] sm:$0xf]
    %v38 = vld [vmem:[%s0] sm:$0xf]
    %v39 = vld [vmem:[%s0 + $0x4] sm:$0xf]
    %v40 = vld [vmem:[%s2] sm:$0xff]
    %v41 = vld [vmem:[%s2 + $0x8] sm:$0xff]
    %v42 = vld [vmem:[%s2 + $0x10] sm:$0xff]
    %v43 = vld [vmem:[%s2 + $0x18] sm:$0xff]
    %v44 = vld [vmem:[%s2 + $0x20] sm:$0xff]
    %v45 = vld [vmem:[%s2 + $0x28] sm:$0xff]
    %v46 = vld [vmem:[%s2 + $0x30] sm:$0xff]
    %v47 = vld [vmem:[%s2 + $0x38] sm:$0xff]
    %49 = vset.pattern.permute.xlu0 0
    %50 = vperm.xlu0 %49, %v40
    %v51 = vpop.permute.xlu0 %50
    %54 = vset.pattern.permute.xlu0 0
    %55 = vperm.xlu0 %54, %v41
    %v56 = vpop.permute.xlu0 %55
    %59 = vset.pattern.permute.xlu0 0
    %60 = vperm.xlu0 %59, %v42
    %v61 = vpop.permute.xlu0 %60
    %64 = vset.pattern.permute.xlu0 0
    %65 = vperm.xlu0 %64, %v43
    %v66 = vpop.permute.xlu0 %65
    %69 = vset.pattern.permute.xlu0 0
    %70 = vperm.xlu0 %69, %v44
    %v71 = vpop.permute.xlu0 %70
    %74 = vset.pattern.permute.xlu0 0
    %75 = vperm.xlu0 %74, %v45
    %v76 = vpop.permute.xlu0 %75
    %79 = vset.pattern.permute.xlu0 0
    %80 = vperm.xlu0 %79, %v46
    %v81 = vpop.permute.xlu0 %80
    %84 = vset.pattern.permute.xlu0 0
    %85 = vperm.xlu0 %84, %v47
    %v86 = vpop.permute.xlu0 %85
    %v96 = vunpack.c.l.b16 %v30
    %v97 = vunpack.c.l.b16 %v31
    %v98 = vunpack.c.l.b16 %v32
    %v99 = vunpack.c.l.b16 %v33
    %v100 = vunpack.c.l.b16 %v34
    %v101 = vunpack.c.l.b16 %v35
    %v102 = vunpack.c.l.b16 %v36
    %v103 = vunpack.c.l.b16 %v37
    %v104 = vpack.c.b16 %v97, %v96
    %v105 = vpack.c.b16 %v99, %v98
    %v106 = vpack.c.b16 %v101, %v100
    %v107 = vpack.c.b16 %v103, %v102
    %v110 = vunpack.c.l.b16 %v38
    %v111 = vunpack.c.l.b16 %v39
    %v112 = vpack.c.b16 %v111, %v110
    %vm114 = vcmask 130048
    %v116 = vsel %vm114, %v104, 0
    %v119 = vsel %vm114, %v105, 0
    %v122 = vsel %vm114, %v106, 0
    %v125 = vsel %vm114, %v107, 0
    %127 = vmatprep.subr.bf16.mxu0 0
    %128 = vmatpush1.bf16.msra.mxu0 0
    %129 = vmatprep.subr.bf16.mxu0 0
    %130 = vmatpush1.bf16.msra.mxu0 0
    %131 = vmatprep.subr.bf16.mxu0 0
    %132 = vmatpush1.bf16.msra.mxu0 0
    %133 = vmatprep.subr.bf16.mxu0 0
    %134 = vmatpush1.bf16.msra.mxu0 0
    %135 = vmatprep.subr.bf16.mxu0 0
    %136 = vmatpush1.bf16.msra.mxu0 0
    %137 = vmatprep.subr.bf16.mxu0 0
    %138 = vmatpush1.bf16.msra.mxu0 0
    %139 = vmatprep.subr.bf16.mxu0 0
    %140 = vmatpush1.bf16.msra.mxu0 0
    %141 = vmatprep.subr.bf16.mxu0 0
    %142 = vmatpush1.bf16.msra.mxu0 %v112
    %143 = vmatprep.subr.bf16.mxu0 0
    %144 = vmatpush2.bf16.msra.mxu0 0
    %145 = vmatprep.subr.bf16.mxu0 0
    %146 = vmatpush2.bf16.msra.mxu0 0
    %147 = vmatprep.subr.bf16.mxu0 0
    %148 = vmatpush2.bf16.msra.mxu0 0
    %149 = vmatprep.subr.bf16.mxu0 0
    %150 = vmatpush2.bf16.msra.mxu0 0
    %151 = vmatprep.subr.bf16.mxu0 0
    %152 = vmatpush2.bf16.msra.mxu0 0
    %153 = vmatprep.subr.bf16.mxu0 0
    %154 = vmatpush2.bf16.msra.mxu0 0
    %155 = vmatprep.subr.bf16.mxu0 0
    %156 = vmatpush2.bf16.msra.mxu0 0
    %157 = vmatprep.subr.bf16.mxu0 0
    %158 = vmatpush2.bf16.msra.mxu0 0
    %159 = vmatprep.mubr.bf16.mxu0 0
    %160 = vmatmul.mubr.bf16.gmra.mxu0 %v116
    %v161 = vpop.f32.mrf.mxu0
    %v162 = vadd.f32 %v51, %v161
    %v163 = vpop.f32.mrf.mxu0
    %v164 = vpop.f32.mrf.mxu0
    %v165 = vadd.f32 %v56, %v164
    %v166 = vpop.f32.mrf.mxu0
    %167 = vmatprep.mubr.bf16.mxu0 0
    %168 = vmatmul.mubr.bf16.gmra.mxu0 %v119
    %v169 = vpop.f32.mrf.mxu0
    %v170 = vadd.f32 %v61, %v169
    %v171 = vpop.f32.mrf.mxu0
    %v172 = vpop.f32.mrf.mxu0
    %v173 = vadd.f32 %v66, %v172
    %v174 = vpop.f32.mrf.mxu0
    %175 = vmatprep.mubr.bf16.mxu0 0
    %176 = vmatmul.mubr.bf16.gmra.mxu0 %v122
    %v177 = vpop.f32.mrf.mxu0
    %v178 = vadd.f32 %v71, %v177
    %v179 = vpop.f32.mrf.mxu0
    %v180 = vpop.f32.mrf.mxu0
    %v181 = vadd.f32 %v76, %v180
    %v182 = vpop.f32.mrf.mxu0
    %183 = vmatprep.mubr.bf16.mxu0 0
    %184 = vmatmul.mubr.bf16.gmra.mxu0 %v125
    %v185 = vpop.f32.mrf.mxu0
    %v186 = vadd.f32 %v81, %v185
    %v187 = vpop.f32.mrf.mxu0
    %v188 = vpop.f32.mrf.mxu0
    %v189 = vadd.f32 %v86, %v188
    %v190 = vpop.f32.mrf.mxu0
    %191 = vdwg.mxu0
    %v192 = vmax.f32 %v162, 0.0
    %v193 = vmax.f32 %v165, 0.0
    %v194 = vmax.f32 %v170, 0.0
    %v195 = vmax.f32 %v173, 0.0
    %v196 = vmax.f32 %v178, 0.0
    %v197 = vmax.f32 %v181, 0.0
    %v198 = vmax.f32 %v186, 0.0
    %v199 = vmax.f32 %v189, 0.0
    %v200 = vld [vmem:[%s3] sm:$0xf]
    %v201 = vld [vmem:[%s3 + $0x4] sm:$0xf]
    %v202 = vld [vmem:[%s3 + $0x8] sm:$0xf]
    %v203 = vld [vmem:[%s3 + $0xc] sm:$0xf]
    %v204 = vpack.c.bf16 %v193, %v192
    %v205 = vpack.c.bf16 %v195, %v194
    %v206 = vpack.c.bf16 %v197, %v196
    %v207 = vpack.c.bf16 %v199, %v198
    %v208 = vld [vmem:[%s4] sm:$0xff]
    %v209 = vld [vmem:[%s4 + $0x8] sm:$0xff]
    %v210 = vld [vmem:[%s4 + $0x10] sm:$0xff]
    %v211 = vld [vmem:[%s4 + $0x18] sm:$0xff]
    %213 = vset.pattern.permute.xlu0 0
    %214 = vperm.xlu0 %213, %v208
    %v215 = vpop.permute.xlu0 %214
    %218 = vset.pattern.permute.xlu0 0
    %219 = vperm.xlu0 %218, %v209
    %v220 = vpop.permute.xlu0 %219
    %223 = vset.pattern.permute.xlu0 0
    %224 = vperm.xlu0 %223, %v210
    %v225 = vpop.permute.xlu0 %224
    %228 = vset.pattern.permute.xlu0 0
    %229 = vperm.xlu0 %228, %v211
    %v230 = vpop.permute.xlu0 %229
    %v236 = vunpack.c.l.b16 %v200
    %v237 = vunpack.c.l.b16 %v201
    %v238 = vunpack.c.l.b16 %v202
    %v239 = vunpack.c.l.b16 %v203
    %v240 = vpack.c.b16 %v237, %v236
    %v241 = vpack.c.b16 %v239, %v238
    %vm242 = vcmask 523264
    %v244 = vsel %vm242, %v240, 0
    %v247 = vsel %vm242, %v241, 0
    %249 = vmatprep.subr.bf16.mxu0 0
    %250 = vmatpush1.bf16.msra.mxu0 0
    %251 = vmatprep.subr.bf16.mxu0 0
    %252 = vmatpush1.bf16.msra.mxu0 0
    %253 = vmatprep.subr.bf16.mxu0 0
    %254 = vmatpush1.bf16.msra.mxu0 0
    %255 = vmatprep.subr.bf16.mxu0 0
    %256 = vmatpush1.bf16.msra.mxu0 0
    %257 = vmatprep.subr.bf16.mxu0 0
    %258 = vmatpush1.bf16.msra.mxu0 %v207
    %259 = vmatprep.subr.bf16.mxu0 0
    %260 = vmatpush1.bf16.msra.mxu0 %v206
    %261 = vmatprep.subr.bf16.mxu0 0
    %262 = vmatpush1.bf16.msra.mxu0 %v205
    %263 = vmatprep.subr.bf16.mxu0 0
    %264 = vmatpush1.bf16.msra.mxu0 %v204
    %265 = vmatprep.subr.bf16.mxu0 0
    %266 = vmatpush2.bf16.msra.mxu0 0
    %267 = vmatprep.subr.bf16.mxu0 0
    %268 = vmatpush2.bf16.msra.mxu0 0
    %269 = vmatprep.subr.bf16.mxu0 0
    %270 = vmatpush2.bf16.msra.mxu0 0
    %271 = vmatprep.subr.bf16.mxu0 0
    %272 = vmatpush2.bf16.msra.mxu0 0
    %273 = vmatprep.subr.bf16.mxu0 0
    %274 = vmatpush2.bf16.msra.mxu0 0
    %275 = vmatprep.subr.bf16.mxu0 0
    %276 = vmatpush2.bf16.msra.mxu0 0
    %277 = vmatprep.subr.bf16.mxu0 0
    %278 = vmatpush2.bf16.msra.mxu0 0
    %279 = vmatprep.subr.bf16.mxu0 0
    %280 = vmatpush2.bf16.msra.mxu0 0
    %281 = vmatprep.mubr.bf16.mxu0 0
    %282 = vmatmul.mubr.bf16.gmra.mxu0 %v244
    %v283 = vpop.f32.mrf.mxu0
    %v284 = vadd.f32 %v215, %v283
    %v285 = vpop.f32.mrf.mxu0
    %v286 = vpop.f32.mrf.mxu0
    %v287 = vadd.f32 %v220, %v286
    %v288 = vpop.f32.mrf.mxu0
    %289 = vmatprep.mubr.bf16.mxu0 0
    %290 = vmatmul.mubr.bf16.gmra.mxu0 %v247
    %v291 = vpop.f32.mrf.mxu0
    %v292 = vadd.f32 %v225, %v291
    %v293 = vpop.f32.mrf.mxu0
    %v294 = vpop.f32.mrf.mxu0
    %v295 = vadd.f32 %v230, %v294
    %v296 = vpop.f32.mrf.mxu0
    %297 = vdwg.mxu0
    %v298 = vmax.f32 %v284, 0.0
    %v299 = vmax.f32 %v287, 0.0
    %v300 = vmax.f32 %v292, 0.0
    %v301 = vmax.f32 %v295, 0.0
    %v302 = vld [vmem:[%s5] sm:$0xff]
    %v303 = vld [vmem:[%s5 + $0x8] sm:$0xff]
    %v304 = vld [vmem:[%s5 + $0x10] sm:$0xff]
    %v305 = vld [vmem:[%s5 + $0x18] sm:$0xff]
    %307 = vset.pattern.permute.xlu0 0
    %308 = vperm.xlu0 %307, %v302
    %v309 = vpop.permute.xlu0 %308
    %312 = vset.pattern.permute.xlu0 0
    %313 = vperm.xlu0 %312, %v303
    %v314 = vpop.permute.xlu0 %313
    %317 = vset.pattern.permute.xlu0 0
    %318 = vperm.xlu0 %317, %v304
    %v319 = vpop.permute.xlu0 %318
    %322 = vset.pattern.permute.xlu0 0
    %323 = vperm.xlu0 %322, %v305
    %v324 = vpop.permute.xlu0 %323
    %v326 = vmul.f32 %v309, %v298
    %v327 = vmul.f32 %v314, %v299
    %v328 = vmul.f32 %v319, %v300
    %v329 = vmul.f32 %v324, %v301
    %v330 = vadd.f32 %v326, %v327
    %v331 = vadd.f32 %v330, %v328
    %v332 = vadd.f32 %v331, %v329
    %v333 = vrot.slane %v332, 4
    %v334 = vadd.f32 %v332, %v333
    %v335 = vrot.slane %v334, 2
    %v336 = vadd.f32 %v334, %v335
    %v337 = vrot.slane %v336, 1
    %v338 = vadd.f32 %v336, %v337
    %v339 = vld [vmem:[#allocation2] sm:$0x1]
    %341 = vset.pattern.permute.xlu0 0
    %342 = vperm.xlu0 %341, %v339
    %v343 = vpop.permute.xlu0 %342
    %v345 = vlaneseq
    %v346 = vshrl.u32 %v345, 7
    %v347 = vsub.s32 0, %v346
    %v348 = vrot.slane %v343, %v347
    %v349 = vadd.f32 %v338, %v348
    %v350 = vsub.f32 0.0, %v349
    %v351 = vmul.f32 %v350, 1.442695
    %v352 = vpow.pop %v351
    %v353 = vadd.f32 %v352, 1.0
    %v354 = vrcp.pop %v353
    %v355 = vmul.f32 1.0, %v354
    %356 = vst [vmem:[#allocation3] sm:$0x1] %v355
    %v357 = vsub.f32 1.0, %v355
    %358 = vst [vmem:[#allocation3 + $0x1] sm:$0x1] %v357
    // Predicated region
    $region30: #{tpu_custom_call.1} parent=1 // pred_check
      _
    $region31: #{tpu_custom_call.1} parent=1 // pred_check_branch
      %360 = sbr.rel (0) target = $region33
    $region32: #{tpu_custom_call.1} parent=1 // pred_region
      %s362 = ssub.s32 32, 32
      %363 = vsyncadd [#allocation4], %s362
      %s365 = sshll.u32 [#allocation3], 4
      %s366 = int_to_ptr.vmem [resolvable:$true] %s365
      %368 = dma.vmem_to_hbm [thread:$0]  %s366, 32, %s7, [#allocation4]
    $region33: #{tpu_custom_call.1} parent=1 // pred_fallthru
      _
    // Predicated region
    $region34: #{tpu_custom_call.1} parent=1 // pred_check
      _
    $region35: #{tpu_custom_call.1} parent=1 // pred_check_branch
      %370 = sbr.rel (0) target = $region37
    $region36: #{tpu_custom_call.1} parent=1 // pred_region
      %371 = dma.done [#allocation4], 32
    $region37: #{tpu_custom_call.1} parent=1 // pred_fallthru
      _
    %372 = vsyncpa [#allocation4], 1

</llo_original>
